<compile_context>
chip_gen: v7x
topology: tpu7x:2x2x1
jax: 0.10.0
libtpu: 0.0.40
codegen_flags: <defaults>
</compile_context>

<pallas_src>
import functools

import jax
import jax.numpy as jnp
from jax.experimental import pallas as pl
from jax.experimental.pallas import tpu as pltpu

_EPS = 1e-6            # matches the 1e-06 in the PyTorch module
_BCE_WEIGHT = 1e-3     # loss2 scale
_SMOOTH_WEIGHT = 0.0   # loss3 scale (kept, as in the module)


def _round_up(x, n):
    return ((x + n - 1) // n) * n


def _sum11(x):
    # Full reduce kept 2-D (lane reduce, then sublane reduce) -> shape (1, 1).
    return jnp.sum(jnp.sum(x, axis=1, keepdims=True), axis=0, keepdims=True)


def _wmse_kernel(y1_ref, y2_ref, d_ref, m_ref, out_ref, *, tb, t, b_true, needs_mask):
    i = pl.program_id(0)

    # Native-dtype loads, free in-kernel upcast to f32 for the math.
    y1 = y1_ref[...].astype(jnp.float32)
    y2 = y2_ref[...].astype(jnp.float32)
    d = d_ref[...].astype(jnp.float32)
    m = m_ref[...].astype(jnp.float32)

    def emit(mask_rows):
        r = y1 - d
        if mask_rows:
            # Rows >= b_true in the last (partial) block are undefined memory; the
            # selects below discard any NaN/Inf they produce.  y2 is additionally
            # clamped on invalid rows so the log inputs stay positive.
            row = jax.lax.broadcasted_iota(jnp.int32, (tb, 1), 0) + i * tb
            valid = row < b_true                      # (tb, 1), broadcasts over lanes
            y2s = jnp.where(valid, y2, 0.5)
            t1 = jnp.where(valid, r * r * m, 0.0)
            t2 = jnp.where(
                valid,
                -(m * jnp.log(y2s + _EPS)) - (1.0 - m) * jnp.log(1.0 - y2s + _EPS),
                0.0)
        else:
            t1 = r * r * m
            t2 = -(m * jnp.log(y2 + _EPS)) - (1.0 - m) * jnp.log(1.0 - y2 + _EPS)

        s1 = _sum11(t1)
        s2 = _sum11(t2)

        if _SMOOTH_WEIGHT != 0.0:
            # loss3 terms: (y1[:, j+1] - y1[:, j])^2 for j < t-1.  Lane roll by
            # t-1 (== -1) brings y1[:, j+1] into lane j; wrap column masked out.
            shifted = pltpu.roll(y1, shift=t - 1, axis=1)
            dv = shifted - y1
            keep = jax.lax.broadcasted_iota(jnp.int32, (tb, t), 1) < (t - 1)
            if mask_rows:
                keep = jnp.logical_and(keep, valid)
            s3 = _sum11(jnp.where(keep, dv * dv, 0.0))
        else:
            s3 = jnp.zeros((1, 1), jnp.float32)

        # Lane-dense partial-sum block: lanes 0/1/2 of sublane 0 carry the sums.
        lane = jax.lax.broadcasted_iota(jnp.int32, (1, 8, 128), 2)
        out_ref[...] = jnp.where(
            lane == 0, s1,
            jnp.where(lane == 1, s2,
                      jnp.where(lane == 2, s3, 0.0)))

    if needs_mask:
        last = pl.num_programs(0) - 1

        @pl.when(i == last)
        def _():
            emit(True)

        @pl.when(i != last)
        def _():
            emit(False)
    else:
        emit(False)


def wmse_loss(y1, y2, d, m, *, block_rows=None, vmem_budget_bytes=16 * 1024 * 1024):
    """Fused WMSELoss forward.  Inputs are (batch, seq) arrays; `m` is the 0/1
    weight/mask.  Returns (loss1, loss2, loss3, total) as f32 scalars."""
    assert y1.ndim == 2, "WMSELoss kernel expects (batch, seq) inputs"
    B, T = y1.shape
    assert y2.shape == (B, T) and d.shape == (B, T) and m.shape == (B, T)
    assert T >= 2

    # Sublane-packing factor: 8 rows for 4-byte dtypes, 16 for 2-byte, 32 for 1-byte.
    itemsizes = [jnp.dtype(x.dtype).itemsize for x in (y1, y2, d, m)]
    sub = max(8, 32 // max(1, min(itemsizes)))

    # Per grid step we hold 4 inputs x 2 pipeline buffers x tb x T; budget-driven tb.
    bytes_per_row_step = 2 * T * sum(itemsizes)
    tb_budget = max(sub, (vmem_budget_bytes // bytes_per_row_step) // sub * sub)
    tb = min(tb_budget, _round_up(B, sub))
    if block_rows is not None:
        tb = min(tb, max(sub, _round_up(block_rows, sub)))

    grid_b = pl.cdiv(B, tb)
    needs_mask = (B % tb) != 0

    kernel = functools.partial(_wmse_kernel, tb=tb, t=T, b_true=B, needs_mask=needs_mask)

    in_block = pl.BlockSpec((tb, T), lambda i: (i, 0))
    out_block = pl.BlockSpec((1, 8, 128), lambda i: (i, 0, 0))

    in_bytes = sum(x.size * jnp.dtype(x.dtype).itemsize for x in (y1, y2, d, m))
    out_bytes = grid_b * 8 * 128 * 4
    vmem_limit = min(int(tb * bytes_per_row_step) + (8 << 20), 100 << 20)

    partials = pl.pallas_call(
        kernel,
        out_shape=jax.ShapeDtypeStruct((grid_b, 8, 128), jnp.float32),
        grid=(grid_b,),
        in_specs=[in_block, in_block, in_block, in_block],
        out_specs=out_block,
        compiler_params=pltpu.CompilerParams(
            dimension_semantics=("parallel",),     # independent blocks -> megacore on v7x
            vmem_limit_bytes=vmem_limit),
        cost_estimate=pl.CostEstimate(
            flops=int(12 * B * T),
            transcendentals=int(2 * B * T),
            bytes_accessed=int(in_bytes + out_bytes)),
    )(y1, y2, d, m)

    # Tiny (grid_b, 128) reduction done by XLA outside the kernel.
    sums = jnp.sum(partials[:, 0, :], axis=0)
    loss1 = sums[0]
    loss2 = sums[1] * _BCE_WEIGHT
    if _SMOOTH_WEIGHT != 0.0:
        loss3 = sums[2] * (_SMOOTH_WEIGHT / float(B * (T - 1)))
    else:
        loss3 = jnp.float32(0.0)
    total = loss1 + loss2 + loss3
    return loss1, loss2, loss3, total


def wmse_loss_ref(y1, y2, d, m):
    """Pure-JAX reference with the exact PyTorch math."""
    y1 = y1.astype(jnp.float32)
    y2 = y2.astype(jnp.float32)
    d = d.astype(jnp.float32)
    m = m.astype(jnp.float32)
    loss1 = jnp.sum(jnp.square(y1 - d) * m)
    loss2 = jnp.sum(-m * jnp.log(y2 + _EPS)
                    - (1.0 - m) * jnp.log(1.0 - y2 + _EPS)) * _BCE_WEIGHT
    loss3 = jnp.mean(jnp.square(y1[:, 1:] - y1[:, :-1])) * _SMOOTH_WEIGHT
    return loss1, loss2, loss3, loss1 + loss2 + loss3


if __name__ == "__main__":
    key = jax.random.PRNGKey(0)
    k1, k2, k3, k4 = jax.random.split(key, 4)

    # Small shapes consistent with a (batch, seq) sequence loss.
    B, T = 10, 256
    y1 = jax.random.normal(k1, (B, T), dtype=jnp.float32)
    y2 = jax.nn.sigmoid(jax.random.normal(k2, (B, T), dtype=jnp.float32))  # in (0, 1)
    d = jax.random.normal(k3, (B, T), dtype=jnp.float32)
    m = (jax.random.uniform(k4, (B, T)) < 0.5).astype(jnp.float32)

    ref = wmse_loss_ref(y1, y2, d, m)
    names = ("loss1", "loss2", "loss3", "total")

    # 1) block_rows=8 -> 2 grid steps; exercises the masked partial last block (rows 8..9).
    out = jax.block_until_ready(wmse_loss(y1, y2, d, m, block_rows=8))
    for name, a, b in zip(names, out, ref):
        assert jnp.allclose(a, b, rtol=2e-3, atol=1e-3), (name, a, b)

    # 2) default budget-driven tile (single partial block, no wrapper padding).
    out = jax.block_until_ready(wmse_loss(y1, y2, d, m))
    for name, a, b in zip(names, out, ref):
        assert jnp.allclose(a, b, rtol=2e-3, atol=1e-3), (name, a, b)

    print("KERNEL_OK")
</pallas_src>

<mosaic_0001>
module attributes {stable_mosaic.version = 11 : i64} {
  func.func @_wmse_kernel(%arg0: i32, %arg1: memref<8x256xf32, #tpu.memory_space<vmem>>, %arg2: memref<8x256xf32, #tpu.memory_space<vmem>>, %arg3: memref<8x256xf32, #tpu.memory_space<vmem>>, %arg4: memref<8x256xf32, #tpu.memory_space<vmem>>, %arg5: memref<1x8x128xf32, #tpu.memory_space<vmem>>) attributes {dimension_semantics = [#tpu.dimension_semantics<parallel>], iteration_bounds = array<i64: 2>, scalar_prefetch = 0 : i64, scratch_operands = 0 : i64, tpu.core_type = #tpu.core_type<tc>, window_params = [{transform_indices = @transform_0, window_bounds = array<i64: 8, 256>}, {transform_indices = @transform_1, window_bounds = array<i64: 8, 256>}, {transform_indices = @transform_2, window_bounds = array<i64: 8, 256>}, {transform_indices = @transform_3, window_bounds = array<i64: 8, 256>}, {transform_indices = @transform_4, window_bounds = array<i64: 1, 8, 128>}]} {
    %c0 = arith.constant 0 : index
    %c0_0 = arith.constant 0 : index
    %0 = vector.load %arg1[%c0, %c0_0] : memref<8x256xf32, #tpu.memory_space<vmem>>, vector<8x256xf32>
    %c0_1 = arith.constant 0 : index
    %c0_2 = arith.constant 0 : index
    %1 = vector.load %arg2[%c0_1, %c0_2] : memref<8x256xf32, #tpu.memory_space<vmem>>, vector<8x256xf32>
    %c0_3 = arith.constant 0 : index
    %c0_4 = arith.constant 0 : index
    %2 = vector.load %arg3[%c0_3, %c0_4] : memref<8x256xf32, #tpu.memory_space<vmem>>, vector<8x256xf32>
    %c0_5 = arith.constant 0 : index
    %c0_6 = arith.constant 0 : index
    %3 = vector.load %arg4[%c0_5, %c0_6] : memref<8x256xf32, #tpu.memory_space<vmem>>, vector<8x256xf32>
    %c1_i32 = arith.constant 1 : i32
    %4 = arith.cmpi eq, %arg0, %c1_i32 : i32
    %5 = arith.extui %4 : i1 to i32
    %c0_i32 = arith.constant 0 : i32
    %6 = arith.cmpi ne, %5, %c0_i32 : i32
    scf.if %6 {
      %10 = arith.subf %0, %2 : vector<8x256xf32>
      %11 = tpu.iota {dimensions = array<i32: 0>} : vector<8x1xi32>
      %c8_i32 = arith.constant 8 : i32
      %12 = arith.muli %arg0, %c8_i32 : i32
      %13 = vector.broadcast %12 : i32 to vector<8x1xi32>
      %14 = arith.addi %11, %13 : vector<8x1xi32>
      %c10_i32 = arith.constant 10 : i32
      %15 = vector.broadcast %c10_i32 : i32 to vector<8x1xi32>
      %16 = arith.cmpi slt, %14, %15 : vector<8x1xi32>
      %cst = arith.constant 5.000000e-01 : f32
      %17 = vector.shape_cast %16 : vector<8x1xi1> to vector<8x1xi1>
      %18 = vector.broadcast %17 : vector<8x1xi1> to vector<8x256xi1>
      %19 = vector.broadcast %cst : f32 to vector<8x256xf32>
      %20 = arith.select %18, %1, %19 : vector<8x256xi1>, vector<8x256xf32>
      %21 = arith.mulf %10, %10 : vector<8x256xf32>
      %22 = arith.mulf %21, %3 : vector<8x256xf32>
      %cst_9 = arith.constant 0.000000e+00 : f32
      %23 = vector.shape_cast %16 : vector<8x1xi1> to vector<8x1xi1>
      %24 = vector.broadcast %23 : vector<8x1xi1> to vector<8x256xi1>
      %25 = vector.broadcast %cst_9 : f32 to vector<8x256xf32>
      %26 = arith.select %24, %22, %25 : vector<8x256xi1>, vector<8x256xf32>
      %cst_10 = arith.constant 9.99999997E-7 : f32
      %27 = vector.broadcast %cst_10 : f32 to vector<8x256xf32>
      %28 = arith.addf %20, %27 : vector<8x256xf32>
      %29 = math.log %28 : vector<8x256xf32>
      %30 = arith.mulf %3, %29 : vector<8x256xf32>
      %cst_11 = arith.constant 0.000000e+00 : f32
      %31 = vector.broadcast %cst_11 : f32 to vector<8x256xf32>
      %32 = arith.subf %31, %30 : vector<8x256xf32>
      %cst_12 = arith.constant 1.000000e+00 : f32
      %33 = vector.broadcast %cst_12 : f32 to vector<8x256xf32>
      %34 = arith.subf %33, %3 : vector<8x256xf32>
      %cst_13 = arith.constant 1.000000e+00 : f32
      %35 = vector.broadcast %cst_13 : f32 to vector<8x256xf32>
      %36 = arith.subf %35, %20 : vector<8x256xf32>
      %cst_14 = arith.constant 9.99999997E-7 : f32
      %37 = vector.broadcast %cst_14 : f32 to vector<8x256xf32>
      %38 = arith.addf %36, %37 : vector<8x256xf32>
      %39 = math.log %38 : vector<8x256xf32>
      %40 = arith.mulf %34, %39 : vector<8x256xf32>
      %41 = arith.subf %32, %40 : vector<8x256xf32>
      %cst_15 = arith.constant 0.000000e+00 : f32
      %42 = vector.shape_cast %16 : vector<8x1xi1> to vector<8x1xi1>
      %43 = vector.broadcast %42 : vector<8x1xi1> to vector<8x256xi1>
      %44 = vector.broadcast %cst_15 : f32 to vector<8x256xf32>
      %45 = arith.select %43, %41, %44 : vector<8x256xi1>, vector<8x256xf32>
      %cst_16 = arith.constant dense<0.000000e+00> : vector<8xf32>
      %46 = vector.multi_reduction <add>, %26, %cst_16 [1] : vector<8x256xf32> to vector<8xf32>
      %47 = vector.shape_cast %46 : vector<8xf32> to vector<8x1xf32>
      %cst_17 = arith.constant dense<0.000000e+00> : vector<1xf32>
      %48 = vector.multi_reduction <add>, %47, %cst_17 [0] : vector<8x1xf32> to vector<1xf32>
      %49 = vector.shape_cast %48 : vector<1xf32> to vector<1x1xf32>
      %cst_18 = arith.constant dense<0.000000e+00> : vector<8xf32>
      %50 = vector.multi_reduction <add>, %45, %cst_18 [1] : vector<8x256xf32> to vector<8xf32>
      %51 = vector.shape_cast %50 : vector<8xf32> to vector<8x1xf32>
      %cst_19 = arith.constant dense<0.000000e+00> : vector<1xf32>
      %52 = vector.multi_reduction <add>, %51, %cst_19 [0] : vector<8x1xf32> to vector<1xf32>
      %53 = vector.shape_cast %52 : vector<1xf32> to vector<1x1xf32>
      %cst_20 = arith.constant 0.000000e+00 : f32
      %54 = vector.broadcast %cst_20 : f32 to vector<1x1xf32>
      %55 = tpu.iota {dimensions = array<i32: 2>} : vector<1x8x128xi32>
      %c0_i32_21 = arith.constant 0 : i32
      %56 = vector.broadcast %c0_i32_21 : i32 to vector<1x8x128xi32>
      %57 = arith.cmpi eq, %55, %56 : vector<1x8x128xi32>
      %c1_i32_22 = arith.constant 1 : i32
      %58 = vector.broadcast %c1_i32_22 : i32 to vector<1x8x128xi32>
      %59 = arith.cmpi eq, %55, %58 : vector<1x8x128xi32>
      %c2_i32 = arith.constant 2 : i32
      %60 = vector.broadcast %c2_i32 : i32 to vector<1x8x128xi32>
      %61 = arith.cmpi eq, %55, %60 : vector<1x8x128xi32>
      %cst_23 = arith.constant 0.000000e+00 : f32
      %62 = vector.shape_cast %54 : vector<1x1xf32> to vector<1x1x1xf32>
      %63 = vector.broadcast %62 : vector<1x1x1xf32> to vector<1x8x128xf32>
      %64 = vector.broadcast %cst_23 : f32 to vector<1x8x128xf32>
      %65 = arith.select %61, %63, %64 : vector<1x8x128xi1>, vector<1x8x128xf32>
      %66 = vector.shape_cast %53 : vector<1x1xf32> to vector<1x1x1xf32>
      %67 = vector.broadcast %66 : vector<1x1x1xf32> to vector<1x8x128xf32>
      %68 = arith.select %59, %67, %65 : vector<1x8x128xi1>, vector<1x8x128xf32>
      %69 = vector.shape_cast %49 : vector<1x1xf32> to vector<1x1x1xf32>
      %70 = vector.broadcast %69 : vector<1x1x1xf32> to vector<1x8x128xf32>
      %71 = arith.select %57, %70, %68 : vector<1x8x128xi1>, vector<1x8x128xf32>
      %c0_24 = arith.constant 0 : index
      %c0_25 = arith.constant 0 : index
      %c0_26 = arith.constant 0 : index
      %72 = vector.load %arg5[%c0_24, %c0_25, %c0_26] : memref<1x8x128xf32, #tpu.memory_space<vmem>>, vector<1x8x128xf32>
      tpu.vector_store %arg5[%c0_24, %c0_25, %c0_26], %71 {strides = array<i32>} : memref<1x8x128xf32, #tpu.memory_space<vmem>>, vector<1x8x128xf32>,
    } else {
    }
    %c1_i32_7 = arith.constant 1 : i32
    %7 = arith.cmpi ne, %arg0, %c1_i32_7 : i32
    %8 = arith.extui %7 : i1 to i32
    %c0_i32_8 = arith.constant 0 : i32
    %9 = arith.cmpi ne, %8, %c0_i32_8 : i32
    scf.if %9 {
      %10 = arith.subf %0, %2 : vector<8x256xf32>
      %11 = arith.mulf %10, %10 : vector<8x256xf32>
      %12 = arith.mulf %11, %3 : vector<8x256xf32>
      %cst = arith.constant 9.99999997E-7 : f32
      %13 = vector.broadcast %cst : f32 to vector<8x256xf32>
      %14 = arith.addf %1, %13 : vector<8x256xf32>
      %15 = math.log %14 : vector<8x256xf32>
      %16 = arith.mulf %3, %15 : vector<8x256xf32>
      %cst_9 = arith.constant 0.000000e+00 : f32
      %17 = vector.broadcast %cst_9 : f32 to vector<8x256xf32>
      %18 = arith.subf %17, %16 : vector<8x256xf32>
      %cst_10 = arith.constant 1.000000e+00 : f32
      %19 = vector.broadcast %cst_10 : f32 to vector<8x256xf32>
      %20 = arith.subf %19, %3 : vector<8x256xf32>
      %cst_11 = arith.constant 1.000000e+00 : f32
      %21 = vector.broadcast %cst_11 : f32 to vector<8x256xf32>
      %22 = arith.subf %21, %1 : vector<8x256xf32>
      %cst_12 = arith.constant 9.99999997E-7 : f32
      %23 = vector.broadcast %cst_12 : f32 to vector<8x256xf32>
      %24 = arith.addf %22, %23 : vector<8x256xf32>
      %25 = math.log %24 : vector<8x256xf32>
      %26 = arith.mulf %20, %25 : vector<8x256xf32>
      %27 = arith.subf %18, %26 : vector<8x256xf32>
      %cst_13 = arith.constant dense<0.000000e+00> : vector<8xf32>
      %28 = vector.multi_reduction <add>, %12, %cst_13 [1] : vector<8x256xf32> to vector<8xf32>
      %29 = vector.shape_cast %28 : vector<8xf32> to vector<8x1xf32>
      %cst_14 = arith.constant dense<0.000000e+00> : vector<1xf32>
      %30 = vector.multi_reduction <add>, %29, %cst_14 [0] : vector<8x1xf32> to vector<1xf32>
      %31 = vector.shape_cast %30 : vector<1xf32> to vector<1x1xf32>
      %cst_15 = arith.constant dense<0.000000e+00> : vector<8xf32>
      %32 = vector.multi_reduction <add>, %27, %cst_15 [1] : vector<8x256xf32> to vector<8xf32>
      %33 = vector.shape_cast %32 : vector<8xf32> to vector<8x1xf32>
      %cst_16 = arith.constant dense<0.000000e+00> : vector<1xf32>
      %34 = vector.multi_reduction <add>, %33, %cst_16 [0] : vector<8x1xf32> to vector<1xf32>
      %35 = vector.shape_cast %34 : vector<1xf32> to vector<1x1xf32>
      %cst_17 = arith.constant 0.000000e+00 : f32
      %36 = vector.broadcast %cst_17 : f32 to vector<1x1xf32>
      %37 = tpu.iota {dimensions = array<i32: 2>} : vector<1x8x128xi32>
      %c0_i32_18 = arith.constant 0 : i32
      %38 = vector.broadcast %c0_i32_18 : i32 to vector<1x8x128xi32>
      %39 = arith.cmpi eq, %37, %38 : vector<1x8x128xi32>
      %c1_i32_19 = arith.constant 1 : i32
      %40 = vector.broadcast %c1_i32_19 : i32 to vector<1x8x128xi32>
      %41 = arith.cmpi eq, %37, %40 : vector<1x8x128xi32>
      %c2_i32 = arith.constant 2 : i32
      %42 = vector.broadcast %c2_i32 : i32 to vector<1x8x128xi32>
      %43 = arith.cmpi eq, %37, %42 : vector<1x8x128xi32>
      %cst_20 = arith.constant 0.000000e+00 : f32
      %44 = vector.shape_cast %36 : vector<1x1xf32> to vector<1x1x1xf32>
      %45 = vector.broadcast %44 : vector<1x1x1xf32> to vector<1x8x128xf32>
      %46 = vector.broadcast %cst_20 : f32 to vector<1x8x128xf32>
      %47 = arith.select %43, %45, %46 : vector<1x8x128xi1>, vector<1x8x128xf32>
      %48 = vector.shape_cast %35 : vector<1x1xf32> to vector<1x1x1xf32>
      %49 = vector.broadcast %48 : vector<1x1x1xf32> to vector<1x8x128xf32>
      %50 = arith.select %41, %49, %47 : vector<1x8x128xi1>, vector<1x8x128xf32>
      %51 = vector.shape_cast %31 : vector<1x1xf32> to vector<1x1x1xf32>
      %52 = vector.broadcast %51 : vector<1x1x1xf32> to vector<1x8x128xf32>
      %53 = arith.select %39, %52, %50 : vector<1x8x128xi1>, vector<1x8x128xf32>
      %c0_21 = arith.constant 0 : index
      %c0_22 = arith.constant 0 : index
      %c0_23 = arith.constant 0 : index
      %54 = vector.load %arg5[%c0_21, %c0_22, %c0_23] : memref<1x8x128xf32, #tpu.memory_space<vmem>>, vector<1x8x128xf32>
      tpu.vector_store %arg5[%c0_21, %c0_22, %c0_23], %53 {strides = array<i32>} : memref<1x8x128xf32, #tpu.memory_space<vmem>>, vector<1x8x128xf32>,
    } else {
    }
    return
  }
  func.func @transform_0(%arg0: i32) -> (i32, i32) {
    %c0_i32 = arith.constant 0 : i32
    %c0_i32_0 = arith.constant 0 : i32
    return %arg0, %c0_i32 : i32, i32
  }
  func.func @transform_1(%arg0: i32) -> (i32, i32) {
    %c0_i32 = arith.constant 0 : i32
    %c0_i32_0 = arith.constant 0 : i32
    return %arg0, %c0_i32 : i32, i32
  }
  func.func @transform_2(%arg0: i32) -> (i32, i32) {
    %c0_i32 = arith.constant 0 : i32
    %c0_i32_0 = arith.constant 0 : i32
    return %arg0, %c0_i32 : i32, i32
  }
  func.func @transform_3(%arg0: i32) -> (i32, i32) {
    %c0_i32 = arith.constant 0 : i32
    %c0_i32_0 = arith.constant 0 : i32
    return %arg0, %c0_i32 : i32, i32
  }
  func.func @transform_4(%arg0: i32) -> (i32, i32, i32) {
    %c0_i32 = arith.constant 0 : i32
    %c0_i32_0 = arith.constant 0 : i32
    %c0_i32_1 = arith.constant 0 : i32
    return %arg0, %c0_i32, %c0_i32_0 : i32, i32, i32
  }
}

</mosaic_0001>

<llo_original>
// kernel: tpu_custom_call.1
$region0: #{tpu_custom_call.1}
  #allocation0 [shape = 'u32[]', space=smem, size = 0x4, offset = 0x4, fixed_abs, tag = 'smem constant byte address 0x4 - core index']
  #allocation1 [shape = 'u32[144,128]{1,0:T(1,128)}', space=vmem, size = 0x12000, scoped, tag = 'internal scratch']
  %s0 = inlined_call_operand.hbm [shape: f32[10,256], index: 0, kind: input, shape index: {}]
  %s1 = inlined_call_operand.hbm [shape: f32[10,256], index: 1, kind: input, shape index: {}]
  %s2 = inlined_call_operand.hbm [shape: f32[10,256], index: 2, kind: input, shape index: {}]
  %s3 = inlined_call_operand.hbm [shape: f32[10,256], index: 3, kind: input, shape index: {}]
  %s4 = inlined_call_operand.hbm [shape: f32[2,8,128], index: 4, kind: output, shape index: {}]
  %s5 = sld [smem:[#allocation0]]
  $region73: #{tpu_custom_call.1} parent=0
    _
  %s7 = ssub.s32 1, %s5
  %s8 = scalar_select 0, %s7, %s5
  $region1: #{tpu_custom_call.1} parent=0
    #allocation2 [shape = 'u8[16384]{0}', space=vmem, size = 0x4000, scoped, tag = 'input window, operand 0']
    #allocation3 [shape = 's32[2]{0}', space=sflag, size = 0x8, scoped, tag = 'scoped memory for tpu_custom_call.1']
    #allocation4 [shape = 's32[2]{0}', space=sflag, size = 0x8, scoped, tag = 'scoped memory for tpu_custom_call.1']
    #allocation5 [shape = 'u8[16384]{0}', space=vmem, size = 0x4000, scoped, tag = 'input window, operand 1']
    #allocation6 [shape = 's32[2]{0}', space=sflag, size = 0x8, scoped, tag = 'scoped memory for tpu_custom_call.1']
    #allocation7 [shape = 'u8[16384]{0}', space=vmem, size = 0x4000, scoped, tag = 'input window, operand 2']
    #allocation8 [shape = 'u8[16384]{0}', space=vmem, size = 0x4000, scoped, tag = 'input window, operand 3']
    #allocation9 [shape = 's32[2]{0}', space=sflag, size = 0x8, scoped, tag = 'scoped memory for tpu_custom_call.1']
    #allocation10 [shape = 'u8[8192]{0}', space=vmem, size = 0x2000, scoped, tag = 'output window, operand 0']
    %9 = vsyncpa [#allocation3], 0
    %s10 = scalar_lea.sflag [#allocation3], 1
    %11 = vsyncpa %s10, 0
    %12 = vsyncpa [#allocation6], 0
    %s13 = scalar_lea.sflag [#allocation6], 1
    %14 = vsyncpa %s13, 0
    %15 = vsyncpa [#allocation9], 0
    %s16 = scalar_lea.sflag [#allocation9], 1
    %17 = vsyncpa %s16, 0
    %18 = vsyncpa [#allocation4], 0
    %s19 = scalar_lea.sflag [#allocation4], 1
    %20 = vsyncpa %s19, 0
    loop: start=0, step=1, limit=4
    $region2: #{tpu_custom_call.1} parent=1 // loop_pre_header
      _
    $region3: #{tpu_custom_call.1} parent=1 // loop_header
      %s22 = sphi 0, %s26
      %p23 = scmp.ge.s32.totalorder %s22, 4
      %s32 = sphi 0, %s34
      %s35 = sphi 0, %s32
      %s36 = sphi 0, %s35
      %s52 = sphi 0, %s36
      %s58 = sphi 0, %s60
      %s61 = sphi 0, %s58
      %s62 = sphi 0, %s61
      %s78 = sphi 0, %s62
      %s84 = sphi 0, %s86
      %s87 = sphi 0, %s84
      %s88 = sphi 0, %s87
      %s104 = sphi 0, %s88
      %s110 = sphi 0, %s112
      %s113 = sphi 0, %s110
      %s114 = sphi 0, %s113
      %s130 = sphi 0, %s114
      %s136 = sphi 0, %s138
      %s139 = sphi 0, %s136
      %s140 = sphi 0, %s139
      %s156 = sphi 0, %s140
    $region4: #{tpu_custom_call.1} parent=1 // loop_header_branch
      %25 = sbr.rel (%p23) target = $region8
    $region5: #{tpu_custom_call.1} parent=1 // loop_body
      %s27 = ssub.s32 %s22, 1
      %s28 = ssub.s32 %s22, 2
      %s29 = sadd.s32 %s22, 1
      %s30 = ssub.s32 %s22, %s29
      %p31 = scmp.eq.s32.totalorder %s30, 0
      %s33 = sadd.s32 %s32, 1
      %s34 = scalar_select %p31, %s32, %s33
      %p37 = pneg %p31
      %p38 = scmp.eq.s32.totalorder %s22, 1
      %p39 = por %p37, %p38
      %p40 = scmp.ne.s32.totalorder %s32, %s35
      %p41 = scmp.eq.s32.totalorder %s22, 0
      %p42 = por %p40, %p41
      %p43 = scmp.ne.s32.totalorder %s32, %s35
      %p44 = scmp.eq.s32.totalorder %s27, 1
      %p45 = por %p43, %p44
      %p46 = scmp.ne.s32.totalorder %s35, %s36
      %p47 = scmp.eq.s32.totalorder %s27, 0
      %p48 = por %p46, %p47
      %p49 = scmp.ne.s32.totalorder %s35, %s36
      %p50 = scmp.eq.s32.totalorder %s28, 1
      %p51 = por %p49, %p50
      %p53 = scmp.ne.s32.totalorder %s36, %s52
      %p54 = scmp.eq.s32.totalorder %s28, 0
      %p55 = por %p53, %p54
      %s56 = ssub.s32 %s22, %s29
      %p57 = scmp.eq.s32.totalorder %s56, 0
      %s59 = sadd.s32 %s58, 1
      %s60 = scalar_select %p57, %s58, %s59
      %p63 = pneg %p57
      %p64 = scmp.eq.s32.totalorder %s22, 1
      %p65 = por %p63, %p64
      %p66 = scmp.ne.s32.totalorder %s58, %s61
      %p67 = scmp.eq.s32.totalorder %s22, 0
      %p68 = por %p66, %p67
      %p69 = scmp.ne.s32.totalorder %s58, %s61
      %p70 = scmp.eq.s32.totalorder %s27, 1
      %p71 = por %p69, %p70
      %p72 = scmp.ne.s32.totalorder %s61, %s62
      %p73 = scmp.eq.s32.totalorder %s27, 0
      %p74 = por %p72, %p73
      %p75 = scmp.ne.s32.totalorder %s61, %s62
      %p76 = scmp.eq.s32.totalorder %s28, 1
      %p77 = por %p75, %p76
      %p79 = scmp.ne.s32.totalorder %s62, %s78
      %p80 = scmp.eq.s32.totalorder %s28, 0
      %p81 = por %p79, %p80
      %s82 = ssub.s32 %s22, %s29
      %p83 = scmp.eq.s32.totalorder %s82, 0
      %s85 = sadd.s32 %s84, 1
      %s86 = scalar_select %p83, %s84, %s85
      %p89 = pneg %p83
      %p90 = scmp.eq.s32.totalorder %s22, 1
      %p91 = por %p89, %p90
      %p92 = scmp.ne.s32.totalorder %s84, %s87
      %p93 = scmp.eq.s32.totalorder %s22, 0
      %p94 = por %p92, %p93
      %p95 = scmp.ne.s32.totalorder %s84, %s87
      %p96 = scmp.eq.s32.totalorder %s27, 1
      %p97 = por %p95, %p96
      %p98 = scmp.ne.s32.totalorder %s87, %s88
      %p99 = scmp.eq.s32.totalorder %s27, 0
      %p100 = por %p98, %p99
      %p101 = scmp.ne.s32.totalorder %s87, %s88
      %p102 = scmp.eq.s32.totalorder %s28, 1
      %p103 = por %p101, %p102
      %p105 = scmp.ne.s32.totalorder %s88, %s104
      %p106 = scmp.eq.s32.totalorder %s28, 0
      %p107 = por %p105, %p106
      %s108 = ssub.s32 %s22, %s29
      %p109 = scmp.eq.s32.totalorder %s108, 0
      %s111 = sadd.s32 %s110, 1
      %s112 = scalar_select %p109, %s110, %s111
      %p115 = pneg %p109
      %p116 = scmp.eq.s32.totalorder %s22, 1
      %p117 = por %p115, %p116
      %p118 = scmp.ne.s32.totalorder %s110, %s113
      %p119 = scmp.eq.s32.totalorder %s22, 0
      %p120 = por %p118, %p119
      %p121 = scmp.ne.s32.totalorder %s110, %s113
      %p122 = scmp.eq.s32.totalorder %s27, 1
      %p123 = por %p121, %p122
      %p124 = scmp.ne.s32.totalorder %s113, %s114
      %p125 = scmp.eq.s32.totalorder %s27, 0
      %p126 = por %p124, %p125
      %p127 = scmp.ne.s32.totalorder %s113, %s114
      %p128 = scmp.eq.s32.totalorder %s28, 1
      %p129 = por %p127, %p128
      %p131 = scmp.ne.s32.totalorder %s114, %s130
      %p132 = scmp.eq.s32.totalorder %s28, 0
      %p133 = por %p131, %p132
      %s134 = ssub.s32 %s22, %s29
      %p135 = scmp.eq.s32.totalorder %s134, 0
      %s137 = sadd.s32 %s136, 1
      %s138 = scalar_select %p135, %s136, %s137
      %p141 = pneg %p135
      %p142 = scmp.eq.s32.totalorder %s22, 1
      %p143 = por %p141, %p142
      %p144 = scmp.ne.s32.totalorder %s136, %s139
      %p145 = scmp.eq.s32.totalorder %s22, 0
      %p146 = por %p144, %p145
      %p147 = scmp.ne.s32.totalorder %s136, %s139
      %p148 = scmp.eq.s32.totalorder %s27, 1
      %p149 = por %p147, %p148
      %p150 = scmp.ne.s32.totalorder %s139, %s140
      %p151 = scmp.eq.s32.totalorder %s27, 0
      %p152 = por %p150, %p151
      %p153 = scmp.ne.s32.totalorder %s139, %s140
      %p154 = scmp.eq.s32.totalorder %s28, 1
      %p155 = por %p153, %p154
      %p157 = scmp.ne.s32.totalorder %s140, %s156
      %p158 = scmp.eq.s32.totalorder %s28, 0
      %p159 = por %p157, %p158
      %p160 = scmp.le.s32.totalorder 1, %s22
      %p161 = scmp.lt.s32.totalorder %s22, 3
      %p162 = pnand %p160, %p161
      %p163 = pneg %p162
      // Predicated region
      $region9: #{tpu_custom_call.1} parent=5 // pred_check
        _
      $region10: #{tpu_custom_call.1} parent=5 // pred_check_branch
        %165 = sbr.rel (%p162) target = $region12
      $region11: #{tpu_custom_call.1} parent=5 // pred_region
        %s166 = ssub.s32 %s22, 1
      $region12: #{tpu_custom_call.1} parent=5 // pred_fallthru
        _
      %p167 = scmp.lt.s32.totalorder %s22, 2
      // Predicated region
      $region13: #{tpu_custom_call.1} parent=5 // pred_check
        %p168 = pneg %p167
      $region14: #{tpu_custom_call.1} parent=5 // pred_check_branch
        %170 = sbr.rel (%p168) target = $region16
      $region15: #{tpu_custom_call.1} parent=5 // pred_region
        // Predicated region
        $region17: #{tpu_custom_call.1} parent=15 // pred_check
          %p171 = pneg %p42
        $region18: #{tpu_custom_call.1} parent=15 // pred_check_branch
          %173 = sbr.rel (%p171) target = $region20
        $region19: #{tpu_custom_call.1} parent=15 // pred_region
          %s174 = sand.u32 %s32, 1
          %s175 = scalar_lea.sflag [#allocation3], %s174
          %s176 = sand.u32 %s32, 1
          %s177 = smul.addr %s176, 16
          %s178 = scalar_lea.vmem [#allocation2], %s177
          %s180 = ssub.s32 256, 256
          %181 = vsyncadd %s175, %s180
          %s182 = smul.addr %s22, 2
          %s183 = smul.addr %s182, 128
          %s184 = scalar_lea.hbm %s0, %s183
          %s186 = sshll.u32 %s178, 4
          %s187 = int_to_ptr.vmem [resolvable:$true] %s186
          %189 = dma.hbm_to_vmem [thread:$0]  %s184, 256, %s187, %s175
        $region20: #{tpu_custom_call.1} parent=15 // pred_fallthru
          _
        // Predicated region
        $region21: #{tpu_custom_call.1} parent=15 // pred_check
          %p190 = pneg %p68
        $region22: #{tpu_custom_call.1} parent=15 // pred_check_branch
          %192 = sbr.rel (%p190) target = $region24
        $region23: #{tpu_custom_call.1} parent=15 // pred_region
          %s193 = sand.u32 %s22, 1
          %s194 = scalar_lea.sflag [#allocation6], %s193
          %s195 = sand.u32 %s58, 1
          %s196 = smul.addr %s195, 16
          %s197 = scalar_lea.vmem [#allocation5], %s196
          %s199 = ssub.s32 256, 256
          %200 = vsyncadd %s194, %s199
          %s201 = smul.addr %s22, 2
          %s202 = smul.addr %s201, 128
          %s203 = scalar_lea.hbm %s1, %s202
          %s205 = sshll.u32 %s197, 4
          %s206 = int_to_ptr.vmem [resolvable:$true] %s205
          %208 = dma.hbm_to_vmem [thread:$0]  %s203, 256, %s206, %s194
        $region24: #{tpu_custom_call.1} parent=15 // pred_fallthru
          _
        // Predicated region
        $region25: #{tpu_custom_call.1} parent=15 // pred_check
          %p209 = pneg %p94
        $region26: #{tpu_custom_call.1} parent=15 // pred_check_branch
          %211 = sbr.rel (%p209) target = $region28
        $region27: #{tpu_custom_call.1} parent=15 // pred_region
          %s212 = sand.u32 %s22, 1
          %s213 = scalar_lea.sflag [#allocation6], %s212
          %s214 = sand.u32 %s84, 1
          %s215 = smul.addr %s214, 16
          %s216 = scalar_lea.vmem [#allocation7], %s215
          %s218 = ssub.s32 256, 256
          %219 = vsyncadd %s213, %s218
          %s220 = smul.addr %s22, 2
          %s221 = smul.addr %s220, 128
          %s222 = scalar_lea.hbm %s2, %s221
          %s224 = sshll.u32 %s216, 4
          %s225 = int_to_ptr.vmem [resolvable:$true] %s224
          %227 = dma.hbm_to_vmem [thread:$0]  %s222, 256, %s225, %s213
        $region28: #{tpu_custom_call.1} parent=15 // pred_fallthru
          _
        // Predicated region
        $region29: #{tpu_custom_call.1} parent=15 // pred_check
          %p228 = pneg %p120
        $region30: #{tpu_custom_call.1} parent=15 // pred_check_branch
          %230 = sbr.rel (%p228) target = $region32
        $region31: #{tpu_custom_call.1} parent=15 // pred_region
          %s231 = sand.u32 %s110, 1
          %s232 = scalar_lea.sflag [#allocation9], %s231
          %s233 = sand.u32 %s110, 1
          %s234 = smul.addr %s233, 16
          %s235 = scalar_lea.vmem [#allocation8], %s234
          %s237 = ssub.s32 256, 256
          %238 = vsyncadd %s232, %s237
          %s239 = smul.addr %s22, 2
          %s240 = smul.addr %s239, 128
          %s241 = scalar_lea.hbm %s3, %s240
          %s243 = sshll.u32 %s235, 4
          %s244 = int_to_ptr.vmem [resolvable:$true] %s243
          %246 = dma.hbm_to_vmem [thread:$0]  %s241, 256, %s244, %s232
        $region32: #{tpu_custom_call.1} parent=15 // pred_fallthru
          _
      $region16: #{tpu_custom_call.1} parent=5 // pred_fallthru
        _
      %p247 = scmp.le.s32.totalorder 1, %s22
      %p248 = scmp.lt.s32.totalorder %s22, 3
      %p249 = pnand %p247, %p248
      %p250 = pneg %p249
      // Predicated region
      $region33: #{tpu_custom_call.1} parent=5 // pred_check
        _
      $region34: #{tpu_custom_call.1} parent=5 // pred_check_branch
        %252 = sbr.rel (%p249) target = $region36
      $region35: #{tpu_custom_call.1} parent=5 // pred_region
        %s253 = ssub.s32 %s22, 1
        %s254 = sand.u32 %s35, 1
        %s255 = scalar_lea.sflag [#allocation3], %s254
        %s256 = sand.u32 %s35, 1
        %s257 = smul.addr %s256, 16
        %s258 = scalar_lea.vmem [#allocation2], %s257
        // Predicated region
        $region37: #{tpu_custom_call.1} parent=35 // pred_check
          %p259 = pneg %p48
        $region38: #{tpu_custom_call.1} parent=35 // pred_check_branch
          %261 = sbr.rel (%p259) target = $region40
        $region39: #{tpu_custom_call.1} parent=35 // pred_region
          %262 = dma.done %s255, 256
        $region40: #{tpu_custom_call.1} parent=35 // pred_fallthru
          _
        %s263 = sand.u32 %s27, 1
        %s264 = scalar_lea.sflag [#allocation6], %s263
        %s265 = sand.u32 %s61, 1
        %s266 = smul.addr %s265, 16
        %s267 = scalar_lea.vmem [#allocation5], %s266
        // Predicated region
        $region41: #{tpu_custom_call.1} parent=35 // pred_check
          %p268 = pneg %p74
        $region42: #{tpu_custom_call.1} parent=35 // pred_check_branch
          %270 = sbr.rel (%p268) target = $region44
        $region43: #{tpu_custom_call.1} parent=35 // pred_region
          %271 = dma.done %s264, 256
        $region44: #{tpu_custom_call.1} parent=35 // pred_fallthru
          _
        %s272 = sand.u32 %s27, 1
        %s273 = scalar_lea.sflag [#allocation6], %s272
        %s274 = sand.u32 %s87, 1
        %s275 = smul.addr %s274, 16
        %s276 = scalar_lea.vmem [#allocation7], %s275
        // Predicated region
        $region45: #{tpu_custom_call.1} parent=35 // pred_check
          %p277 = pneg %p100
        $region46: #{tpu_custom_call.1} parent=35 // pred_check_branch
          %279 = sbr.rel (%p277) target = $region48
        $region47: #{tpu_custom_call.1} parent=35 // pred_region
          %280 = dma.done %s273, 256
        $region48: #{tpu_custom_call.1} parent=35 // pred_fallthru
          _
        %s281 = sand.u32 %s113, 1
        %s282 = scalar_lea.sflag [#allocation9], %s281
        %s283 = sand.u32 %s113, 1
        %s284 = smul.addr %s283, 16
        %s285 = scalar_lea.vmem [#allocation8], %s284
        // Predicated region
        $region49: #{tpu_custom_call.1} parent=35 // pred_check
          %p286 = pneg %p126
        $region50: #{tpu_custom_call.1} parent=35 // pred_check_branch
          %288 = sbr.rel (%p286) target = $region52
        $region51: #{tpu_custom_call.1} parent=35 // pred_region
          %289 = dma.done %s282, 256
        $region52: #{tpu_custom_call.1} parent=35 // pred_fallthru
          _
        %s290 = sand.u32 %s35, 1
        %s291 = scalar_lea.sflag [#allocation3], %s290
        %s292 = sand.u32 %s35, 1
        %s293 = smul.addr %s292, 16
        %s294 = scalar_lea.vmem [#allocation2], %s293
        %p295 = pneg %p48
        %p296 = pneg %p45
        %s297 = sand.u32 %s27, 1
        %s298 = scalar_lea.sflag [#allocation6], %s297
        %s299 = sand.u32 %s61, 1
        %s300 = smul.addr %s299, 16
        %s301 = scalar_lea.vmem [#allocation5], %s300
        %p302 = pneg %p74
        %p303 = pneg %p71
        %s304 = sand.u32 %s27, 1
        %s305 = scalar_lea.sflag [#allocation6], %s304
        %s306 = sand.u32 %s87, 1
        %s307 = smul.addr %s306, 16
        %s308 = scalar_lea.vmem [#allocation7], %s307
        %p309 = pneg %p100
        %p310 = pneg %p97
        %s311 = sand.u32 %s113, 1
        %s312 = scalar_lea.sflag [#allocation9], %s311
        %s313 = sand.u32 %s113, 1
        %s314 = smul.addr %s313, 16
        %s315 = scalar_lea.vmem [#allocation8], %s314
        %p316 = pneg %p126
        %p317 = pneg %p123
        %p318 = pneg %p152
        %p319 = pneg %p149
        %s320 = sand.u32 %s139, 1
        %s321 = scalar_lea.sflag [#allocation4], %s320
        %s322 = sand.u32 %s139, 1
        %s323 = smul.addr %s322, 8
        %s324 = scalar_lea.vmem [#allocation10], %s323
        %v325 = vld [vmem:[%s258] sm:$0xff]
        %v326 = vld [vmem:[%s258 + $0x8] sm:$0xff]
        %v327 = vld [vmem:[%s267] sm:$0xff]
        %v328 = vld [vmem:[%s267 + $0x8] sm:$0xff]
        %v329 = vld [vmem:[%s276] sm:$0xff]
        %v330 = vld [vmem:[%s276 + $0x8] sm:$0xff]
        %v331 = vld [vmem:[%s285] sm:$0xff]
        %v332 = vld [vmem:[%s285 + $0x8] sm:$0xff]
        %p333 = scmp.eq.s32.totalorder %s27, 1
        // Predicated region
        $region53: #{tpu_custom_call.1} parent=35 // pred_check
          %p334 = pneg %p333
        $region54: #{tpu_custom_call.1} parent=35 // pred_check_branch
          %336 = sbr.rel (%p334) target = $region56
        $region55: #{tpu_custom_call.1} parent=35 // pred_region
          %v337 = vsub.f32 %v325, %v329
          %v338 = vsub.f32 %v326, %v330
          %v339 = vlaneseq
          %v340 = vshrl.u32 %v339, 7
          %s341 = smul.u32 %s27, 8
          %v342 = vstv %s341
          %v343 = vadd.s32 %v340, %v342
          %vm344 = vcmp.lt.s32.totalorder %v343, 10
          %v345 = vsel %vm344, 1, 0
          %vm346 = vcmp.eq.s32.totalorder %v345, 1
          %v347 = vsel %vm346, %v327, 0.5
          %v348 = vsel %vm346, %v328, 0.5
          %v349 = vmul.f32 %v337, %v337
          %v350 = vmul.f32 %v338, %v338
          %v351 = vmul.f32 %v349, %v331
          %v352 = vmul.f32 %v350, %v332
          %v353 = vsel %vm346, %v351, 0.0
          %v354 = vsel %vm346, %v352, 0.0
          %v355 = vadd.f32 %v347, 1e-06
          %v356 = vadd.f32 %v348, 1e-06
          %v357 = vlog2.pop %v355
          %v358 = vmul.f32 %v357, 0.6931472
          %v359 = vlog2.pop %v356
          %v360 = vmul.f32 %v359, 0.6931472
          %v361 = vmul.f32 %v331, %v358
          %v362 = vmul.f32 %v332, %v360
          %v363 = vsub.f32 0.0, %v361
          %v364 = vsub.f32 0.0, %v362
          %v365 = vsub.f32 1.0, %v331
          %v366 = vsub.f32 1.0, %v332
          %v367 = vsub.f32 1.0, %v347
          %v368 = vsub.f32 1.0, %v348
          %v369 = vadd.f32 %v367, 1e-06
          %v370 = vadd.f32 %v368, 1e-06
          %v371 = vlog2.pop %v369
          %v372 = vmul.f32 %v371, 0.6931472
          %v373 = vlog2.pop %v370
          %v374 = vmul.f32 %v373, 0.6931472
          %v375 = vmul.f32 %v365, %v372
          %v376 = vmul.f32 %v366, %v374
          %v377 = vsub.f32 %v363, %v375
          %v378 = vsub.f32 %v364, %v376
          %v379 = vsel %vm346, %v377, 0.0
          %v380 = vsel %vm346, %v378, 0.0
          %v381 = vadd.f32 %v353, %v354
          %382 = vadd.xlane.f32.xlu0 %v381
          %v383 = vpop.xlane.xlu0 %382
          %v384 = vrot.slane %v383, 4
          %v385 = vadd.f32 %v383, %v384
          %v386 = vrot.slane %v385, 2
          %v387 = vadd.f32 %v385, %v386
          %v388 = vrot.slane %v387, 1
          %v389 = vadd.f32 %v387, %v388
          %v390 = vadd.f32 %v379, %v380
          %391 = vadd.xlane.f32.xlu0 %v390
          %v392 = vpop.xlane.xlu0 %391
          %v393 = vrot.slane %v392, 4
          %v394 = vadd.f32 %v392, %v393
          %v395 = vrot.slane %v394, 2
          %v396 = vadd.f32 %v394, %v395
          %v397 = vrot.slane %v396, 1
          %v398 = vadd.f32 %v396, %v397
          %v399 = vlaneseq
          %v400 = vand.u32 %v399, 127
          %vm401 = vcmp.eq.s32.totalorder %v400, 0
          %vm402 = vcmp.eq.s32.totalorder %v400, 1
          %v403 = vsel %vm402, %v398, 0.0
          %v404 = vsel %vm401, %v389, %v403
          %405 = vst [vmem:[%s324] sm:$0xff] %v404
        $region56: #{tpu_custom_call.1} parent=35 // pred_fallthru
          _
        %p406 = scmp.ne.s32.totalorder %s27, 1
        // Predicated region
        $region57: #{tpu_custom_call.1} parent=35 // pred_check
          %p407 = pneg %p406
        $region58: #{tpu_custom_call.1} parent=35 // pred_check_branch
          %409 = sbr.rel (%p407) target = $region60
        $region59: #{tpu_custom_call.1} parent=35 // pred_region
          %v410 = vsub.f32 %v325, %v329
          %v411 = vsub.f32 %v326, %v330
          %v412 = vmul.f32 %v410, %v410
          %v413 = vmul.f32 %v411, %v411
          %v414 = vmul.f32 %v412, %v331
          %v415 = vmul.f32 %v413, %v332
          %v416 = vadd.f32 %v327, 1e-06
          %v417 = vadd.f32 %v328, 1e-06
          %v418 = vlog2.pop %v416
          %v419 = vmul.f32 %v418, 0.6931472
          %v420 = vlog2.pop %v417
          %v421 = vmul.f32 %v420, 0.6931472
          %v422 = vmul.f32 %v331, %v419
          %v423 = vmul.f32 %v332, %v421
          %v424 = vsub.f32 0.0, %v422
          %v425 = vsub.f32 0.0, %v423
          %v426 = vsub.f32 1.0, %v331
          %v427 = vsub.f32 1.0, %v332
          %v428 = vsub.f32 1.0, %v327
          %v429 = vsub.f32 1.0, %v328
          %v430 = vadd.f32 %v428, 1e-06
          %v431 = vadd.f32 %v429, 1e-06
          %v432 = vlog2.pop %v430
          %v433 = vmul.f32 %v432, 0.6931472
          %v434 = vlog2.pop %v431
          %v435 = vmul.f32 %v434, 0.6931472
          %v436 = vmul.f32 %v426, %v433
          %v437 = vmul.f32 %v427, %v435
          %v438 = vsub.f32 %v424, %v436
          %v439 = vsub.f32 %v425, %v437
          %v440 = vadd.f32 %v414, %v415
          %441 = vadd.xlane.f32.xlu0 %v440
          %v442 = vpop.xlane.xlu0 %441
          %v443 = vrot.slane %v442, 4
          %v444 = vadd.f32 %v442, %v443
          %v445 = vrot.slane %v444, 2
          %v446 = vadd.f32 %v444, %v445
          %v447 = vrot.slane %v446, 1
          %v448 = vadd.f32 %v446, %v447
          %v449 = vadd.f32 %v438, %v439
          %450 = vadd.xlane.f32.xlu0 %v449
          %v451 = vpop.xlane.xlu0 %450
          %v452 = vrot.slane %v451, 4
          %v453 = vadd.f32 %v451, %v452
          %v454 = vrot.slane %v453, 2
          %v455 = vadd.f32 %v453, %v454
          %v456 = vrot.slane %v455, 1
          %v457 = vadd.f32 %v455, %v456
          %v458 = vlaneseq
          %v459 = vand.u32 %v458, 127
          %vm460 = vcmp.eq.s32.totalorder %v459, 0
          %vm461 = vcmp.eq.s32.totalorder %v459, 1
          %v462 = vsel %vm461, %v457, 0.0
          %v463 = vsel %vm460, %v448, %v462
          %464 = vst [vmem:[%s324] sm:$0xff] %v463
        $region60: #{tpu_custom_call.1} parent=35 // pred_fallthru
          _
        %s465 = sand.u32 %s139, 1
        %s466 = scalar_lea.sflag [#allocation4], %s465
        %s467 = sand.u32 %s139, 1
        %s468 = smul.addr %s467, 8
        %s469 = scalar_lea.vmem [#allocation10], %s468
        // Predicated region
        $region61: #{tpu_custom_call.1} parent=35 // pred_check
          %p470 = pneg %p149
        $region62: #{tpu_custom_call.1} parent=35 // pred_check_branch
          %472 = sbr.rel (%p470) target = $region64
        $region63: #{tpu_custom_call.1} parent=35 // pred_region
          %s474 = ssub.s32 128, 128
          %475 = vsyncadd %s466, %s474
          %s476 = smul.addr %s27, 128
          %s477 = scalar_lea.hbm %s4, %s476
          %s479 = sshll.u32 %s469, 4
          %s480 = int_to_ptr.vmem [resolvable:$true] %s479
          %482 = dma.vmem_to_hbm [thread:$0]  %s480, 128, %s477, %s466
        $region64: #{tpu_custom_call.1} parent=35 // pred_fallthru
          _
      $region36: #{tpu_custom_call.1} parent=5 // pred_fallthru
        _
      %p483 = scmp.le.s32.totalorder 2, %s22
      // Predicated region
      $region65: #{tpu_custom_call.1} parent=5 // pred_check
        %p484 = pneg %p483
      $region66: #{tpu_custom_call.1} parent=5 // pred_check_branch
        %486 = sbr.rel (%p484) target = $region68
      $region67: #{tpu_custom_call.1} parent=5 // pred_region
        %s487 = ssub.s32 %s22, 2
        // Predicated region
        $region69: #{tpu_custom_call.1} parent=67 // pred_check
          %p488 = pneg %p155
        $region70: #{tpu_custom_call.1} parent=67 // pred_check_branch
          %490 = sbr.rel (%p488) target = $region72
        $region71: #{tpu_custom_call.1} parent=67 // pred_region
          %s491 = sand.u32 %s140, 1
          %s492 = scalar_lea.sflag [#allocation4], %s491
          %s493 = sand.u32 %s140, 1
          %s494 = smul.addr %s493, 8
          %s495 = scalar_lea.vmem [#allocation10], %s494
          %496 = dma.done %s492, 128
        $region72: #{tpu_custom_call.1} parent=67 // pred_fallthru
          _
      $region68: #{tpu_custom_call.1} parent=5 // pred_fallthru
        _
    $region6: #{tpu_custom_call.1} parent=1 // loop_footer
      %s26 = sadd.s32 1, %s22
    $region7: #{tpu_custom_call.1} parent=1 // loop_footer_branch
      %21 = sbr.rel target = $region3
    $region8: #{tpu_custom_call.1} parent=1 // loop_exit
      _
    %497 = vsyncpa [#allocation3], 1
    %s498 = scalar_lea.sflag [#allocation3], 1
    %499 = vsyncpa %s498, 1
    %500 = vsyncpa [#allocation6], 1
    %s501 = scalar_lea.sflag [#allocation6], 1
    %502 = vsyncpa %s501, 1
    %503 = vsyncpa [#allocation9], 1
    %s504 = scalar_lea.sflag [#allocation9], 1
    %505 = vsyncpa %s504, 1
    %506 = vsyncpa [#allocation4], 1
    %s507 = scalar_lea.sflag [#allocation4], 1
    %508 = vsyncpa %s507, 1

</llo_original>
